<compile_context>
chip_gen: v6e
topology: v6e:2x2x1
jax: 0.10.0
libtpu: 0.0.40
codegen_flags: <defaults>
</compile_context>

<pallas_src>
import math

import jax
import jax.numpy as jnp
from jax import lax
from jax.experimental import pallas as pl
from jax.experimental.pallas import tpu as pltpu


# ----------------------------------------------------------------------------
# Fully fused CNN kernel
#
# Layouts (per image, all rows are "spatial position" rows, channels last):
#   xb   : (441, 16)  row A*21+B holds the 4x4 input block at (4A, 4B),
#                     channel u*4+v = offset inside the block.
#   act1 : conv1 out, spatial (h, w) at row 21*h + w        (20x20x32 valid)
#   act2 : conv2 out, spatial (h, w) at row 42*h + 2*w      ( 9x 9x64 valid)
#   act3 : conv3 out, spatial (h, w) at row 42*h + 2*w      ( 7x 7x32 valid)
# "Junk" rows (row indices not of the valid form) receive garbage but are
# never read by the next layer:
#   conv2 reads act1 rows 21*(2oh+i) + (2ow+j), j+2ow <= 19  -> never %21==20
#   conv3 reads act2 rows 42*a + 2*b with a,b <= 8           -> always valid
#   fc    reads act3 rows 42*oh + 2*ow with oh,ow <= 6       -> always valid
# ----------------------------------------------------------------------------
_ROWS1 = 19 * 21 + 19 + 1   # 419 conv1 accumulator rows
_ROWS2 = 42 * 8 + 2 * 8 + 1  # 353 conv2 accumulator rows
_ROWS3 = 42 * 6 + 2 * 6 + 1  # 265 conv3 accumulator rows

_TAPS1 = [21 * p + q for p in range(2) for q in range(2)]          # 4 tap-groups
_TAPS2 = [21 * i + j for i in range(4) for j in range(4)]          # 16 taps
_TAPS3 = [42 * i + 2 * j for i in range(3) for j in range(3)]      # 9 taps


def _cnn_fused_kernel(xb_ref, w1_ref, b1_ref, w2_ref, b2_ref, w3_ref, b3_ref,
                      wfc_ref, bfc_ref, out_ref, act1_ref, act2_ref, act3_ref):
    def slab_conv(load_lhs, dst_ref, w_ref, b_ref, tap_starts, n_rows, chunk=128):
        # dst[s, :] = relu(b + sum_t src[tap_starts[t] + s, :] @ w_ref[t]),
        # processed in row-chunks so accumulators stay in vregs.
        bias = b_ref[...]
        for c0 in range(0, n_rows, chunk):
            cs = min(chunk, n_rows - c0)
            acc = None
            for t, s0 in enumerate(tap_starts):
                y = jnp.dot(load_lhs(s0 + c0, cs), w_ref[t],
                            preferred_element_type=jnp.float32)
                acc = y if acc is None else acc + y
            dst_ref[c0:c0 + cs, :] = jnp.maximum(acc + bias, 0.0)

    # conv1: 8x8 stride-4 (from the stride-4 blocked input; /255 folded in w1)
    slab_conv(lambda s, n: xb_ref[0, s:s + n, :], act1_ref, w1_ref, b1_ref,
              _TAPS1, _ROWS1)
    # conv2: 4x4 stride-2
    slab_conv(lambda s, n: act1_ref[s:s + n, :], act2_ref, w2_ref, b2_ref,
              _TAPS2, _ROWS2)
    # conv3: 3x3 stride-1
    slab_conv(lambda s, n: act2_ref[s:s + n, :], act3_ref, w3_ref, b3_ref,
              _TAPS3, _ROWS3)

    # fc + ReLU over the 49 valid act3 positions.  PyTorch's channel-major
    # flatten (c*49 + oh*7 + ow) is folded into the pre-permuted wfc (pos,C,H).
    acc = bfc_ref[...]
    for oh in range(7):
        for ow in range(7):
            r = 42 * oh + 2 * ow
            acc = acc + jnp.dot(act3_ref[r:r + 1, :], wfc_ref[7 * oh + ow],
                                preferred_element_type=jnp.float32)
    out_ref[0] = jnp.maximum(acc, 0.0)


def _space_to_depth4(x):
    """(N, 1, 84, 84) -> (N, 441, 16); one cheap layout transpose of the input."""
    n, c, h, w = x.shape
    assert (c, h, w) == (1, 84, 84), "CNNBase implies 1x84x84 observations"
    xb = x[:, 0].astype(jnp.float32).reshape(n, 21, 4, 21, 4)
    return xb.transpose(0, 1, 3, 2, 4).reshape(n, 441, 16)


def target_net_cnn_forward(x, kp):
    """CNNBase branch, fully fused into one Pallas kernel (grid over batch)."""
    n = x.shape[0]
    hidden = kp["bfc"].shape[1]
    xb = _space_to_depth4(x)
    out = pl.pallas_call(
        _cnn_fused_kernel,
        out_shape=jax.ShapeDtypeStruct((n, 1, hidden), jnp.float32),
        grid_spec=pltpu.PrefetchScalarGridSpec(
            num_scalar_prefetch=0,
            grid=(n,),
            in_specs=[
                pl.BlockSpec((1, 441, 16), lambda i: (i, 0, 0)),     # xb
                pl.BlockSpec((4, 16, 32), lambda i: (0, 0, 0)),      # w1 (taps,Ci,Co)
                pl.BlockSpec((1, 32), lambda i: (0, 0)),             # b1
                pl.BlockSpec((16, 32, 64), lambda i: (0, 0, 0)),     # w2
                pl.BlockSpec((1, 64), lambda i: (0, 0)),             # b2
                pl.BlockSpec((9, 64, 32), lambda i: (0, 0, 0)),      # w3
                pl.BlockSpec((1, 32), lambda i: (0, 0)),             # b3
                pl.BlockSpec((49, 32, hidden), lambda i: (0, 0, 0)),  # wfc (pos,C,H)
                pl.BlockSpec((1, hidden), lambda i: (0, 0)),         # bfc
            ],
            out_specs=pl.BlockSpec((1, 1, hidden), lambda i: (i, 0, 0)),
            scratch_shapes=[
                pltpu.VMEM((424, 32), jnp.float32),   # act1 (>= 419 rows)
                pltpu.VMEM((360, 64), jnp.float32),   # act2 (>= 353 rows)
                pltpu.VMEM((272, 32), jnp.float32),   # act3 (>= 265 rows)
            ],
        ),
        compiler_params=pltpu.CompilerParams(dimension_semantics=("parallel",)),
    )(xb, kp["w1g"], kp["b1"], kp["w2t"], kp["b2"], kp["w3t"], kp["b3"],
      kp["wfc"], kp["bfc"])
    return out.reshape(n, hidden)


# ----------------------------------------------------------------------------
# Fused MLP (Base branch): tanh(tanh(x @ W1 + b1) @ W2 + b2)
# ----------------------------------------------------------------------------
def _mlp_fused_kernel(x_ref, w1_ref, b1_ref, w2_ref, b2_ref, o_ref):
    h = jnp.tanh(jnp.dot(x_ref[...], w1_ref[...],
                         preferred_element_type=jnp.float32) + b1_ref[...])
    o_ref[...] = jnp.tanh(jnp.dot(h, w2_ref[...],
                                  preferred_element_type=jnp.float32) + b2_ref[...])


def target_net_mlp_forward(x, kp):
    m, k = x.shape
    hidden = kp["w1t"].shape[1]
    tm = m
    if m > 256:  # row-tile large batches; weights are tiny and stay resident
        for cand in (256, 128, 64, 32, 16, 8):
            if m % cand == 0:
                tm = cand
                break
    grid = (pl.cdiv(m, tm),)
    return pl.pallas_call(
        _mlp_fused_kernel,
        out_shape=jax.ShapeDtypeStruct((m, hidden), jnp.float32),
        grid_spec=pltpu.PrefetchScalarGridSpec(
            num_scalar_prefetch=0,
            grid=grid,
            in_specs=[
                pl.BlockSpec((tm, k), lambda i: (i, 0)),
                pl.BlockSpec((k, hidden), lambda i: (0, 0)),
                pl.BlockSpec((1, hidden), lambda i: (0, 0)),
                pl.BlockSpec((hidden, hidden), lambda i: (0, 0)),
                pl.BlockSpec((1, hidden), lambda i: (0, 0)),
            ],
            out_specs=pl.BlockSpec((tm, hidden), lambda i: (i, 0)),
        ),
        compiler_params=pltpu.CompilerParams(dimension_semantics=("parallel",)),
    )(x.astype(jnp.float32), kp["w1t"], kp["b1"], kp["w2t"], kp["b2"])


def target_net_forward(x, kernel_params, obs_ndim):
    if obs_ndim == 1:
        return target_net_mlp_forward(x, kernel_params)
    elif obs_ndim == 3:
        return target_net_cnn_forward(x, kernel_params)
    raise NotImplementedError


# ----------------------------------------------------------------------------
# Parameter construction (PyTorch layout, orthogonal init, zero bias) and
# one-time preparation of kernel-ready (pre-transposed / pre-scaled) weights.
# ----------------------------------------------------------------------------
def make_base_params(key, num_input, hidden):
    k1, k2 = jax.random.split(key)
    ortho = jax.nn.initializers.orthogonal(scale=math.sqrt(2.0))
    # TODO(synk): Base.input_layer exists in the PyTorch module but is unused
    # by forward(), so it is intentionally not materialized here.
    return {
        "w1": ortho(k1, (hidden, num_input), jnp.float32),   # PyTorch (out, in)
        "b1": jnp.zeros((hidden,), jnp.float32),
        "w2": ortho(k2, (hidden, hidden), jnp.float32),
        "b2": jnp.zeros((hidden,), jnp.float32),
    }


def make_cnn_params(key, hidden):
    ks = jax.random.split(key, 4)
    ortho = jax.nn.initializers.orthogonal(scale=math.sqrt(2.0))  # relu gain
    return {
        "c1_w": ortho(ks[0], (32, 1, 8, 8), jnp.float32),
        "c1_b": jnp.zeros((32,), jnp.float32),
        "c2_w": ortho(ks[1], (64, 32, 4, 4), jnp.float32),
        "c2_b": jnp.zeros((64,), jnp.float32),
        "c3_w": ortho(ks[2], (32, 64, 3, 3), jnp.float32),
        "c3_b": jnp.zeros((32,), jnp.float32),
        "fc_w": ortho(ks[3], (hidden, 32 * 7 * 7), jnp.float32),
        "fc_b": jnp.zeros((hidden,), jnp.float32),
    }


def prepare_mlp_kernel_params(p):
    hidden = p["w1"].shape[0]
    return {
        "w1t": p["w1"].T.astype(jnp.float32),                 # (in, H)
        "b1": p["b1"].reshape(1, hidden).astype(jnp.float32),
        "w2t": p["w2"].T.astype(jnp.float32),                 # (H, H)
        "b2": p["b2"].reshape(1, hidden).astype(jnp.float32),
    }


def prepare_cnn_kernel_params(p):
    hidden = p["fc_w"].shape[0]
    # conv1 (32,1,8,8): tap (i,j)=(4p+u,4q+v) -> w1g[p*2+q, u*4+v, oc]; /255 folded.
    w1 = p["c1_w"][:, 0].reshape(32, 2, 4, 2, 4)
    w1g = w1.transpose(1, 3, 2, 4, 0).reshape(4, 16, 32) / 255.0
    # conv2 (64,32,4,4) -> (taps=16, Cin=32, Cout=64)
    w2t = p["c2_w"].transpose(2, 3, 1, 0).reshape(16, 32, 64)
    # conv3 (32,64,3,3) -> (taps=9, Cin=64, Cout=32)
    w3t = p["c3_w"].transpose(2, 3, 1, 0).reshape(9, 64, 32)
    # fc (H, 32*7*7) with PyTorch channel-major flatten -> (pos=49, C=32, H)
    wfc = p["fc_w"].reshape(hidden, 32, 49).transpose(2, 1, 0)
    return {
        "w1g": jnp.asarray(w1g, jnp.float32),
        "b1": p["c1_b"].reshape(1, 32).astype(jnp.float32),
        "w2t": jnp.asarray(w2t, jnp.float32),
        "b2": p["c2_b"].reshape(1, 64).astype(jnp.float32),
        "w3t": jnp.asarray(w3t, jnp.float32),
        "b3": p["c3_b"].reshape(1, 32).astype(jnp.float32),
        "wfc": jnp.asarray(wfc, jnp.float32),
        "bfc": p["fc_b"].reshape(1, hidden).astype(jnp.float32),
    }


# ----------------------------------------------------------------------------
# Pure-JAX references for correctness checking
# ----------------------------------------------------------------------------
def mlp_reference(x, p):
    h = jnp.tanh(x @ p["w1"].T + p["b1"])
    return jnp.tanh(h @ p["w2"].T + p["b2"])


def cnn_reference(x, p):
    dn = ("NCHW", "OIHW", "NCHW")
    h = x / 255.0
    for w, b, s in [(p["c1_w"], p["c1_b"], 4),
                    (p["c2_w"], p["c2_b"], 2),
                    (p["c3_w"], p["c3_b"], 1)]:
        h = lax.conv_general_dilated(h, w, (s, s), "VALID", dimension_numbers=dn)
        h = jnp.maximum(h + b.reshape(1, -1, 1, 1), 0.0)
    h = h.reshape(h.shape[0], -1)
    return jnp.maximum(h @ p["fc_w"].T + p["fc_b"], 0.0)


# ----------------------------------------------------------------------------
if __name__ == "__main__":
    root = jax.random.PRNGKey(0)
    k_pm, k_pc, k_xm, k_xc = jax.random.split(root, 4)

    # --- 1-D obs space branch (Base: MLP) ---
    num_input, hidden_mlp, batch = 16, 32, 2
    mlp_params = make_base_params(k_pm, num_input, hidden_mlp)
    mlp_kp = prepare_mlp_kernel_params(mlp_params)
    x_vec = jax.random.normal(k_xm, (batch, num_input), jnp.float32)
    out_mlp = jax.block_until_ready(target_net_forward(x_vec, mlp_kp, obs_ndim=1))
    ref_mlp = mlp_reference(x_vec, mlp_params)
    assert out_mlp.shape == (batch, hidden_mlp)
    assert jnp.allclose(out_mlp, ref_mlp, rtol=1e-3, atol=1e-2), \
        float(jnp.max(jnp.abs(out_mlp - ref_mlp)))

    # --- 3-D obs space branch (CNNBase); 32*7*7 flatten implies 1x84x84 input ---
    hidden_cnn = 64
    cnn_params = make_cnn_params(k_pc, hidden_cnn)
    cnn_kp = prepare_cnn_kernel_params(cnn_params)
    x_img = jax.random.uniform(k_xc, (batch, 1, 84, 84), jnp.float32, 0.0, 255.0)
    out_cnn = jax.block_until_ready(target_net_forward(x_img, cnn_kp, obs_ndim=3))
    ref_cnn = cnn_reference(x_img, cnn_params)
    assert out_cnn.shape == (batch, hidden_cnn)
    assert jnp.allclose(out_cnn, ref_cnn, rtol=1e-3, atol=1e-2), \
        float(jnp.max(jnp.abs(out_cnn - ref_cnn)))

    print("KERNEL_OK")
</pallas_src>

<mosaic_0001>
module attributes {stable_mosaic.version = 11 : i64} {
  func.func @_mlp_fused_kernel(%arg0: i32, %arg1: memref<2x16xf32, #tpu.memory_space<vmem>>, %arg2: memref<16x32xf32, #tpu.memory_space<vmem>>, %arg3: memref<1x32xf32, #tpu.memory_space<vmem>>, %arg4: memref<32x32xf32, #tpu.memory_space<vmem>>, %arg5: memref<1x32xf32, #tpu.memory_space<vmem>>, %arg6: memref<2x32xf32, #tpu.memory_space<vmem>>) attributes {dimension_semantics = [#tpu.dimension_semantics<parallel>], iteration_bounds = array<i64: 1>, scalar_prefetch = 0 : i64, scratch_operands = 0 : i64, tpu.core_type = #tpu.core_type<tc>, window_params = [{transform_indices = @transform_0, window_bounds = array<i64: 2, 16>}, {pipeline_mode = #tpu.pipeline_mode<synchronous>, transform_indices = @transform_1, window_bounds = array<i64: 16, 32>}, {pipeline_mode = #tpu.pipeline_mode<synchronous>, transform_indices = @transform_2, window_bounds = array<i64: 1, 32>}, {pipeline_mode = #tpu.pipeline_mode<synchronous>, transform_indices = @transform_3, window_bounds = array<i64: 32, 32>}, {pipeline_mode = #tpu.pipeline_mode<synchronous>, transform_indices = @transform_4, window_bounds = array<i64: 1, 32>}, {transform_indices = @transform_5, window_bounds = array<i64: 2, 32>}]} {
    %c0 = arith.constant 0 : index
    %c0_0 = arith.constant 0 : index
    %0 = vector.load %arg1[%c0, %c0_0] : memref<2x16xf32, #tpu.memory_space<vmem>>, vector<2x16xf32>
    %c0_1 = arith.constant 0 : index
    %c0_2 = arith.constant 0 : index
    %1 = vector.load %arg2[%c0_1, %c0_2] : memref<16x32xf32, #tpu.memory_space<vmem>>, vector<16x32xf32>
    %cst = arith.constant dense<0.000000e+00> : vector<2x32xf32>
    %2 = tpu.matmul %0, %1, %cst {dimension_numbers = #tpu.dot_dimension_numbers<[1], [0], [0], [1], [0, 0, 1, 1], [], []>} : vector<2x16xf32>, vector<16x32xf32>, vector<2x32xf32> -> vector<2x32xf32>
    %c0_3 = arith.constant 0 : index
    %c0_4 = arith.constant 0 : index
    %3 = vector.load %arg3[%c0_3, %c0_4] : memref<1x32xf32, #tpu.memory_space<vmem>>, vector<1x32xf32>
    %4 = vector.broadcast %3 : vector<1x32xf32> to vector<2x32xf32>
    %5 = arith.addf %2, %4 : vector<2x32xf32>
    %6 = math.tanh %5 : vector<2x32xf32>
    %c0_5 = arith.constant 0 : index
    %c0_6 = arith.constant 0 : index
    %7 = vector.load %arg4[%c0_5, %c0_6] : memref<32x32xf32, #tpu.memory_space<vmem>>, vector<32x32xf32>
    %cst_7 = arith.constant dense<0.000000e+00> : vector<2x32xf32>
    %8 = tpu.matmul %6, %7, %cst_7 {dimension_numbers = #tpu.dot_dimension_numbers<[1], [0], [0], [1], [0, 0, 1, 1], [], []>} : vector<2x32xf32>, vector<32x32xf32>, vector<2x32xf32> -> vector<2x32xf32>
    %c0_8 = arith.constant 0 : index
    %c0_9 = arith.constant 0 : index
    %9 = vector.load %arg5[%c0_8, %c0_9] : memref<1x32xf32, #tpu.memory_space<vmem>>, vector<1x32xf32>
    %10 = vector.broadcast %9 : vector<1x32xf32> to vector<2x32xf32>
    %11 = arith.addf %8, %10 : vector<2x32xf32>
    %12 = math.tanh %11 : vector<2x32xf32>
    %c0_10 = arith.constant 0 : index
    %c0_11 = arith.constant 0 : index
    %13 = vector.load %arg6[%c0_10, %c0_11] : memref<2x32xf32, #tpu.memory_space<vmem>>, vector<2x32xf32>
    tpu.vector_store %arg6[%c0_10, %c0_11], %12 {strides = array<i32>} : memref<2x32xf32, #tpu.memory_space<vmem>>, vector<2x32xf32>,
    return
  }
  func.func @transform_0(%arg0: i32) -> (i32, i32) {
    %c0_i32 = arith.constant 0 : i32
    %c0_i32_0 = arith.constant 0 : i32
    return %arg0, %c0_i32 : i32, i32
  }
  func.func @transform_1(%arg0: i32) -> (i32, i32) {
    %c0_i32 = arith.constant 0 : i32
    %c0_i32_0 = arith.constant 0 : i32
    %c0_i32_1 = arith.constant 0 : i32
    return %c0_i32, %c0_i32_0 : i32, i32
  }
  func.func @transform_2(%arg0: i32) -> (i32, i32) {
    %c0_i32 = arith.constant 0 : i32
    %c0_i32_0 = arith.constant 0 : i32
    %c0_i32_1 = arith.constant 0 : i32
    return %c0_i32, %c0_i32_0 : i32, i32
  }
  func.func @transform_3(%arg0: i32) -> (i32, i32) {
    %c0_i32 = arith.constant 0 : i32
    %c0_i32_0 = arith.constant 0 : i32
    %c0_i32_1 = arith.constant 0 : i32
    return %c0_i32, %c0_i32_0 : i32, i32
  }
  func.func @transform_4(%arg0: i32) -> (i32, i32) {
    %c0_i32 = arith.constant 0 : i32
    %c0_i32_0 = arith.constant 0 : i32
    %c0_i32_1 = arith.constant 0 : i32
    return %c0_i32, %c0_i32_0 : i32, i32
  }
  func.func @transform_5(%arg0: i32) -> (i32, i32) {
    %c0_i32 = arith.constant 0 : i32
    %c0_i32_0 = arith.constant 0 : i32
    return %arg0, %c0_i32 : i32, i32
  }
}

</mosaic_0001>

<llo_original>
// kernel: tpu_custom_call.1
$region0: #{tpu_custom_call.1}
  #allocation0 [shape = 'u32[]', space=smem, size = 0x4, offset = 0x4, fixed_abs, tag = 'smem constant byte address 0x4 - core index']
  #allocation1 [shape = 'u32[144,128]{1,0:T(1,128)}', space=vmem, size = 0x12000, scoped, tag = 'internal scratch']
  %s0 = inlined_call_operand.hbm [shape: f32[2,16], index: 0, kind: input, shape index: {}]
  %s1 = inlined_call_operand.hbm [shape: f32[16,32], index: 1, kind: input, shape index: {}]
  %s2 = inlined_call_operand.vmem [shape: f32[1,32], index: 2, kind: input, shape index: {}]
  %s3 = inlined_call_operand.hbm [shape: f32[32,32], index: 3, kind: input, shape index: {}]
  %s4 = inlined_call_operand.vmem [shape: f32[1,32], index: 4, kind: input, shape index: {}]
  %s5 = inlined_call_operand.hbm [shape: f32[2,32], index: 5, kind: output, shape index: {}]
  %s6 = sld [smem:[#allocation0]]
  $region42: #{tpu_custom_call.1} parent=0
    _
  %s8 = ssub.s32 1, %s6
  %s9 = scalar_select 0, %s8, %s6
  $region1: #{tpu_custom_call.1} parent=0
    #allocation2 [shape = 'u8[1024]{0}', space=vmem, size = 0x400, scoped, tag = 'input window, operand 0, single buffered']
    #allocation3 [shape = 's32[1]{0}', space=sflag, size = 0x4, scoped, tag = 'scoped memory for tpu_custom_call.1']
    #allocation4 [shape = 's32[1]{0}', space=sflag, size = 0x4, scoped, tag = 'scoped memory for tpu_custom_call.1']
    #allocation5 [shape = 'u8[8192]{0}', space=vmem, size = 0x2000, scoped, tag = 'input window, operand 1, single buffered']
    #allocation6 [shape = 's32[1]{0}', space=sflag, size = 0x4, scoped, tag = 'scoped memory for tpu_custom_call.1']
    #allocation7 [shape = 'u8[16384]{0}', space=vmem, size = 0x4000, scoped, tag = 'input window, operand 3, single buffered']
    #allocation8 [shape = 'u8[1024]{0}', space=vmem, size = 0x400, scoped, tag = 'output window, operand 0, single buffered']
    %10 = vsyncpa [#allocation3], 0
    %11 = vsyncpa [#allocation6], 0
    %12 = vsyncpa [#allocation4], 0
    // Predicated region
    $region2: #{tpu_custom_call.1} parent=1 // pred_check
      _
    $region3: #{tpu_custom_call.1} parent=1 // pred_check_branch
      %14 = sbr.rel (0) target = $region5
    $region4: #{tpu_custom_call.1} parent=1 // pred_region
      %s16 = ssub.s32 32, 32
      %17 = vsyncadd [#allocation3], %s16
      %s19 = sshll.u32 [#allocation2], 4
      %s20 = int_to_ptr.vmem [resolvable:$true] %s19
      %22 = dma.hbm_to_vmem [thread:$0]  %s0, 32, %s20, [#allocation3]
    $region5: #{tpu_custom_call.1} parent=1 // pred_fallthru
      _
    // Predicated region
    $region6: #{tpu_custom_call.1} parent=1 // pred_check
      _
    $region7: #{tpu_custom_call.1} parent=1 // pred_check_branch
      %24 = sbr.rel (0) target = $region9
    $region8: #{tpu_custom_call.1} parent=1 // pred_region
      %s26 = ssub.s32 256, 256
      %27 = vsyncadd [#allocation6], %s26
      %s28 = sshll.u32 [#allocation5], 4
      %s29 = int_to_ptr.vmem [resolvable:$true] %s28
      %34 = dma.hbm_to_vmem [thread:$0]  %s1, 256, %s29, [#allocation6], 128, 128, 8
    $region9: #{tpu_custom_call.1} parent=1 // pred_fallthru
      _
    // Predicated region
    $region10: #{tpu_custom_call.1} parent=1 // pred_check
      _
    $region11: #{tpu_custom_call.1} parent=1 // pred_check_branch
      %36 = sbr.rel (0) target = $region13
    $region12: #{tpu_custom_call.1} parent=1 // pred_region
      _
    $region13: #{tpu_custom_call.1} parent=1 // pred_fallthru
      _
    // Predicated region
    $region14: #{tpu_custom_call.1} parent=1 // pred_check
      _
    $region15: #{tpu_custom_call.1} parent=1 // pred_check_branch
      %38 = sbr.rel (0) target = $region17
    $region16: #{tpu_custom_call.1} parent=1 // pred_region
      %s40 = ssub.s32 512, 512
      %41 = vsyncadd [#allocation6], %s40
      %s42 = sshll.u32 [#allocation7], 4
      %s43 = int_to_ptr.vmem [resolvable:$true] %s42
      %48 = dma.hbm_to_vmem [thread:$0]  %s3, 512, %s43, [#allocation6], 128, 128, 8
    $region17: #{tpu_custom_call.1} parent=1 // pred_fallthru
      _
    // Predicated region
    $region18: #{tpu_custom_call.1} parent=1 // pred_check
      _
    $region19: #{tpu_custom_call.1} parent=1 // pred_check_branch
      %50 = sbr.rel (0) target = $region21
    $region20: #{tpu_custom_call.1} parent=1 // pred_region
      _
    $region21: #{tpu_custom_call.1} parent=1 // pred_fallthru
      _
    // Predicated region
    $region22: #{tpu_custom_call.1} parent=1 // pred_check
      _
    $region23: #{tpu_custom_call.1} parent=1 // pred_check_branch
      %52 = sbr.rel (0) target = $region25
    $region24: #{tpu_custom_call.1} parent=1 // pred_region
      %53 = dma.done [#allocation3], 32
    $region25: #{tpu_custom_call.1} parent=1 // pred_fallthru
      _
    // Predicated region
    $region26: #{tpu_custom_call.1} parent=1 // pred_check
      _
    $region27: #{tpu_custom_call.1} parent=1 // pred_check_branch
      %55 = sbr.rel (0) target = $region29
    $region28: #{tpu_custom_call.1} parent=1 // pred_region
      %56 = dma.done [#allocation6], 256
    $region29: #{tpu_custom_call.1} parent=1 // pred_fallthru
      _
    // Predicated region
    $region30: #{tpu_custom_call.1} parent=1 // pred_check
      _
    $region31: #{tpu_custom_call.1} parent=1 // pred_check_branch
      %58 = sbr.rel (0) target = $region33
    $region32: #{tpu_custom_call.1} parent=1 // pred_region
      %59 = dma.done [#allocation6], 512
    $region33: #{tpu_custom_call.1} parent=1 // pred_fallthru
      _
    %v60 = vld [vmem:[#allocation2] sm:$0x3]
    %v61 = vld [vmem:[#allocation5] sm:$0xff]
    %v62 = vld [vmem:[#allocation5 + $0x8] sm:$0xff]
    %v63 = vld [vmem:[%s2] sm:$0x1]
    %v65 = vlaneseq
    %v66 = vshrl.u32 %v65, 7
    %v67 = vsub.s32 0, %v66
    %v68 = vrot.slane %v63, %v67
    %vm70 = vcmask 130048
    %v72 = vsel %vm70, %v60, 0
    %74 = vmatprep.subr.mxu0 0.0
    %75 = vmatpush1.msra.mxu0 0.0
    %76 = vmatprep.subr.mxu0 0.0
    %77 = vmatpush1.msra.mxu0 0.0
    %78 = vmatprep.subr.mxu0 0.0
    %79 = vmatpush1.msra.mxu0 0.0
    %80 = vmatprep.subr.mxu0 0.0
    %81 = vmatpush1.msra.mxu0 0.0
    %82 = vmatprep.subr.mxu0 0.0
    %83 = vmatpush1.msra.mxu0 0.0
    %84 = vmatprep.subr.mxu0 0.0
    %85 = vmatpush1.msra.mxu0 0.0
    %86 = vmatprep.subr.mxu0 0.0
    %87 = vmatpush1.msra.mxu0 0.0
    %88 = vmatprep.subr.mxu0 0.0
    %89 = vmatpush1.msra.mxu0 0.0
    %90 = vmatprep.subr.mxu0 0.0
    %91 = vmatpush1.msra.mxu0 0.0
    %92 = vmatprep.subr.mxu0 0.0
    %93 = vmatpush1.msra.mxu0 0.0
    %94 = vmatprep.subr.mxu0 0.0
    %95 = vmatpush1.msra.mxu0 0.0
    %96 = vmatprep.subr.mxu0 0.0
    %97 = vmatpush1.msra.mxu0 0.0
    %98 = vmatprep.subr.mxu0 0.0
    %99 = vmatpush1.msra.mxu0 0.0
    %100 = vmatprep.subr.mxu0 0.0
    %101 = vmatpush1.msra.mxu0 0.0
    %102 = vmatprep.subr.mxu0 0.0
    %103 = vmatpush1.msra.mxu0 %v62
    %104 = vmatprep.subr.mxu0 0.0
    %105 = vmatpush1.msra.mxu0 %v61
    %106 = vmatprep.subr.mxu0 0.0
    %107 = vmatpush2.msra.mxu0 0.0
    %108 = vmatprep.subr.mxu0 0.0
    %109 = vmatpush2.msra.mxu0 0.0
    %110 = vmatprep.subr.mxu0 0.0
    %111 = vmatpush2.msra.mxu0 0.0
    %112 = vmatprep.subr.mxu0 0.0
    %113 = vmatpush2.msra.mxu0 0.0
    %114 = vmatprep.subr.mxu0 0.0
    %115 = vmatpush2.msra.mxu0 0.0
    %116 = vmatprep.subr.mxu0 0.0
    %117 = vmatpush2.msra.mxu0 0.0
    %118 = vmatprep.subr.mxu0 0.0
    %119 = vmatpush2.msra.mxu0 0.0
    %120 = vmatprep.subr.mxu0 0.0
    %121 = vmatpush2.msra.mxu0 0.0
    %122 = vmatprep.subr.mxu0 0.0
    %123 = vmatpush2.msra.mxu0 0.0
    %124 = vmatprep.subr.mxu0 0.0
    %125 = vmatpush2.msra.mxu0 0.0
    %126 = vmatprep.subr.mxu0 0.0
    %127 = vmatpush2.msra.mxu0 0.0
    %128 = vmatprep.subr.mxu0 0.0
    %129 = vmatpush2.msra.mxu0 0.0
    %130 = vmatprep.subr.mxu0 0.0
    %131 = vmatpush2.msra.mxu0 0.0
    %132 = vmatprep.subr.mxu0 0.0
    %133 = vmatpush2.msra.mxu0 0.0
    %134 = vmatprep.subr.mxu0 0.0
    %135 = vmatpush2.msra.mxu0 0.0
    %136 = vmatprep.subr.mxu0 0.0
    %137 = vmatpush2.msra.mxu0 0.0
    %138 = vmatprep.mubr.f32.mxu0 0.0
    %139 = vmatmul.mubr.f32.gmra.mxu0 %v72
    %v140 = vpop.f32.mrf.mxu0
    %v141 = vadd.f32 %v68, %v140
    %v142 = vpop.f32.mrf.mxu0
    %143 = vdwg.mxu0
    %v144 = vtanh.pop %v141
    %v145 = vld [vmem:[#allocation7] sm:$0xff]
    %v146 = vld [vmem:[#allocation7 + $0x8] sm:$0xff]
    %v147 = vld [vmem:[#allocation7 + $0x10] sm:$0xff]
    %v148 = vld [vmem:[#allocation7 + $0x18] sm:$0xff]
    %v149 = vld [vmem:[%s4] sm:$0x1]
    %v151 = vlaneseq
    %v152 = vshrl.u32 %v151, 7
    %v153 = vsub.s32 0, %v152
    %v154 = vrot.slane %v149, %v153
    %vm156 = vcmask 261120
    %v158 = vsel %vm156, %v144, 0
    %160 = vmatprep.subr.mxu0 0.0
    %161 = vmatpush1.msra.mxu0 0.0
    %162 = vmatprep.subr.mxu0 0.0
    %163 = vmatpush1.msra.mxu0 0.0
    %164 = vmatprep.subr.mxu0 0.0
    %165 = vmatpush1.msra.mxu0 0.0
    %166 = vmatprep.subr.mxu0 0.0
    %167 = vmatpush1.msra.mxu0 0.0
    %168 = vmatprep.subr.mxu0 0.0
    %169 = vmatpush1.msra.mxu0 0.0
    %170 = vmatprep.subr.mxu0 0.0
    %171 = vmatpush1.msra.mxu0 0.0
    %172 = vmatprep.subr.mxu0 0.0
    %173 = vmatpush1.msra.mxu0 0.0
    %174 = vmatprep.subr.mxu0 0.0
    %175 = vmatpush1.msra.mxu0 0.0
    %176 = vmatprep.subr.mxu0 0.0
    %177 = vmatpush1.msra.mxu0 0.0
    %178 = vmatprep.subr.mxu0 0.0
    %179 = vmatpush1.msra.mxu0 0.0
    %180 = vmatprep.subr.mxu0 0.0
    %181 = vmatpush1.msra.mxu0 0.0
    %182 = vmatprep.subr.mxu0 0.0
    %183 = vmatpush1.msra.mxu0 0.0
    %184 = vmatprep.subr.mxu0 0.0
    %185 = vmatpush1.msra.mxu0 %v148
    %186 = vmatprep.subr.mxu0 0.0
    %187 = vmatpush1.msra.mxu0 %v147
    %188 = vmatprep.subr.mxu0 0.0
    %189 = vmatpush1.msra.mxu0 %v146
    %190 = vmatprep.subr.mxu0 0.0
    %191 = vmatpush1.msra.mxu0 %v145
    %192 = vmatprep.subr.mxu0 0.0
    %193 = vmatpush2.msra.mxu0 0.0
    %194 = vmatprep.subr.mxu0 0.0
    %195 = vmatpush2.msra.mxu0 0.0
    %196 = vmatprep.subr.mxu0 0.0
    %197 = vmatpush2.msra.mxu0 0.0
    %198 = vmatprep.subr.mxu0 0.0
    %199 = vmatpush2.msra.mxu0 0.0
    %200 = vmatprep.subr.mxu0 0.0
    %201 = vmatpush2.msra.mxu0 0.0
    %202 = vmatprep.subr.mxu0 0.0
    %203 = vmatpush2.msra.mxu0 0.0
    %204 = vmatprep.subr.mxu0 0.0
    %205 = vmatpush2.msra.mxu0 0.0
    %206 = vmatprep.subr.mxu0 0.0
    %207 = vmatpush2.msra.mxu0 0.0
    %208 = vmatprep.subr.mxu0 0.0
    %209 = vmatpush2.msra.mxu0 0.0
    %210 = vmatprep.subr.mxu0 0.0
    %211 = vmatpush2.msra.mxu0 0.0
    %212 = vmatprep.subr.mxu0 0.0
    %213 = vmatpush2.msra.mxu0 0.0
    %214 = vmatprep.subr.mxu0 0.0
    %215 = vmatpush2.msra.mxu0 0.0
    %216 = vmatprep.subr.mxu0 0.0
    %217 = vmatpush2.msra.mxu0 0.0
    %218 = vmatprep.subr.mxu0 0.0
    %219 = vmatpush2.msra.mxu0 0.0
    %220 = vmatprep.subr.mxu0 0.0
    %221 = vmatpush2.msra.mxu0 0.0
    %222 = vmatprep.subr.mxu0 0.0
    %223 = vmatpush2.msra.mxu0 0.0
    %224 = vmatprep.mubr.f32.mxu0 0.0
    %225 = vmatmul.mubr.f32.gmra.mxu0 %v158
    %v226 = vpop.f32.mrf.mxu0
    %v227 = vadd.f32 %v154, %v226
    %v228 = vpop.f32.mrf.mxu0
    %229 = vdwg.mxu0
    %v230 = vtanh.pop %v227
    %vm231 = vcmask 254976
    %232 = vst.msk [vmem:[#allocation8] sm:$0x3] %vm231, %v230
    // Predicated region
    $region34: #{tpu_custom_call.1} parent=1 // pred_check
      _
    $region35: #{tpu_custom_call.1} parent=1 // pred_check_branch
      %234 = sbr.rel (0) target = $region37
    $region36: #{tpu_custom_call.1} parent=1 // pred_region
      %s236 = ssub.s32 32, 32
      %237 = vsyncadd [#allocation4], %s236
      %s239 = sshll.u32 [#allocation8], 4
      %s240 = int_to_ptr.vmem [resolvable:$true] %s239
      %242 = dma.vmem_to_hbm [thread:$0]  %s240, 32, %s5, [#allocation4]
    $region37: #{tpu_custom_call.1} parent=1 // pred_fallthru
      _
    // Predicated region
    $region38: #{tpu_custom_call.1} parent=1 // pred_check
      _
    $region39: #{tpu_custom_call.1} parent=1 // pred_check_branch
      %244 = sbr.rel (0) target = $region41
    $region40: #{tpu_custom_call.1} parent=1 // pred_region
      %245 = dma.done [#allocation4], 32
    $region41: #{tpu_custom_call.1} parent=1 // pred_fallthru
      _
    %246 = vsyncpa [#allocation3], 1
    %247 = vsyncpa [#allocation6], 1
    %248 = vsyncpa [#allocation4], 1

</llo_original>
